<compile_context>
chip_gen: v7x
topology: tpu7x:2x2x1
jax: 0.10.0
libtpu: 0.0.40
codegen_flags: <defaults>
</compile_context>

<pallas_src>
import jax
import jax.numpy as jnp
from jax.experimental import pallas as pl
from jax.experimental.pallas import tpu as pltpu


_VMEM_BUDGET_BYTES = 24 * 1024 * 1024  # conservative vs. v7x 32 MiB scoped default


def _scale_mul_kernel(x_ref, s_ref, o_ref):
    # Pure VPU broadcast multiply.  s_ref broadcasts against x_ref:
    #   (.., 1, C) row    -> sublane broadcast (channels-last path)
    #   (R, 1)   column   -> lane broadcast    (NCHW compat path)
    o_ref[...] = x_ref[...] * s_ref[...]


def _round_up(v, m):
    return (v + m - 1) // m * m


def _pick_block_rows(total_rows, lane_bytes, target_bytes=2 * 1024 * 1024):
    """Rows per block (multiple of 8) so one block is ~target_bytes."""
    br = max(8, (target_bytes // lane_bytes) // 8 * 8)
    return int(min(br, _round_up(total_rows, 8)))


def se_mul_channels_last(x_nhwc, scale):
    """Preferred lane-dense path: x in NHWC, scale is the (N, C, 1, 1) SE gate.

    Lane axis = C, so vregs/stores/DMAs are dense; the gate is a tiny
    sublane-broadcast row instead of a lane-padded column.
    """
    N, H, W, C = x_nhwc.shape
    assert scale.size == N * C
    HW = H * W
    x3 = x_nhwc.reshape(N, HW, C)          # contiguous view, no data movement
    s3 = scale.reshape(N, 1, C)            # dense (1, C) row per batch element

    itemsize = x3.dtype.itemsize
    lane_bytes = _round_up(C, 128) * itemsize
    padded_x = N * _round_up(HW, 8) * lane_bytes
    padded_s = N * 8 * lane_bytes

    if 2 * padded_x + padded_s <= _VMEM_BUDGET_BYTES:
        # Whole operand in VMEM, single step: no grid overhead at this size.
        out = pl.pallas_call(
            _scale_mul_kernel,
            out_shape=jax.ShapeDtypeStruct((N, HW, C), x3.dtype),
            in_specs=[
                pl.BlockSpec(memory_space=pltpu.MemorySpace.VMEM),
                pl.BlockSpec(memory_space=pltpu.MemorySpace.VMEM),
            ],
            out_specs=pl.BlockSpec(memory_space=pltpu.MemorySpace.VMEM),
            input_output_aliases={0: 0},
        )(x3, s3)
    else:
        # Large-shape fallback: tile the spatial rows, parallel over (N, tiles)
        # so v7x's two TensorCores can split the memory-bound work.
        br = _pick_block_rows(HW, lane_bytes)
        out = pl.pallas_call(
            _scale_mul_kernel,
            out_shape=jax.ShapeDtypeStruct((N, HW, C), x3.dtype),
            grid=(N, pl.cdiv(HW, br)),
            in_specs=[
                pl.BlockSpec((1, br, C), lambda n, i: (n, i, 0)),
                pl.BlockSpec((1, 1, C), lambda n, i: (n, 0, 0)),
            ],
            out_specs=pl.BlockSpec((1, br, C), lambda n, i: (n, i, 0)),
            input_output_aliases={0: 0},
            compiler_params=pltpu.CompilerParams(
                dimension_semantics=("parallel", "parallel")),
        )(x3, s3)
    return out.reshape(N, H, W, C)


def se_mul_nchw(x_nchw, scale):
    """Module-faithful NCHW interface (x567 * x572).

    Deliberately no transpose here (it would cost a full extra memory pass);
    the 49-wide lane axis is the price of the producer's NCHW layout.
    """
    N, C, H, W = x_nchw.shape
    assert scale.shape == (N, C, 1, 1)
    NC, HW = N * C, H * W
    x2 = x_nchw.reshape(NC, HW)            # contiguous view of NCHW
    s2 = scale.reshape(NC, 1)

    itemsize = x2.dtype.itemsize
    lane_bytes = _round_up(HW, 128) * itemsize
    padded_x = _round_up(NC, 8) * lane_bytes
    padded_s = _round_up(NC, 8) * 128 * itemsize

    if 2 * padded_x + padded_s <= _VMEM_BUDGET_BYTES:
        out = pl.pallas_call(
            _scale_mul_kernel,
            out_shape=jax.ShapeDtypeStruct((NC, HW), x2.dtype),
            in_specs=[
                pl.BlockSpec(memory_space=pltpu.MemorySpace.VMEM),
                pl.BlockSpec(memory_space=pltpu.MemorySpace.VMEM),
            ],
            out_specs=pl.BlockSpec(memory_space=pltpu.MemorySpace.VMEM),
            input_output_aliases={0: 0},
        )(x2, s2)
    else:
        br = _pick_block_rows(NC, lane_bytes)
        out = pl.pallas_call(
            _scale_mul_kernel,
            out_shape=jax.ShapeDtypeStruct((NC, HW), x2.dtype),
            grid=(pl.cdiv(NC, br),),
            in_specs=[
                pl.BlockSpec((br, HW), lambda i: (i, 0)),
                pl.BlockSpec((br, 1), lambda i: (i, 0)),
            ],
            out_specs=pl.BlockSpec((br, HW), lambda i: (i, 0)),
            input_output_aliases={0: 0},
            compiler_params=pltpu.CompilerParams(
                dimension_semantics=("parallel",)),
        )(x2, s2)
    return out.reshape(N, C, H, W)


if __name__ == "__main__":
    key = jax.random.PRNGKey(0)
    k1, k2, k3, k4 = jax.random.split(key, 4)

    # Shapes from the PyTorch module: x567 [1, 2064, 7, 7], x572 [1, 2064, 1, 1]
    x567 = jax.random.normal(k1, (1, 2064, 7, 7), dtype=jnp.float32)
    x572 = jax.random.normal(k2, (1, 2064, 1, 1), dtype=jnp.float32)
    ref = x567 * x572  # computed before any (possibly aliasing) kernel call

    # --- Preferred lane-dense path (producer hands us NHWC). The transpose
    # below is demo-only scaffolding to build that NHWC input; it is NOT part
    # of the wrapper (per the perf review).
    x567_nhwc = jnp.transpose(x567, (0, 2, 3, 1))
    out_nhwc = se_mul_channels_last(x567_nhwc, x572)
    out_from_nhwc = jnp.transpose(out_nhwc, (0, 3, 1, 2))

    # --- Module-faithful NCHW path (no transpose anywhere).
    out_nchw = se_mul_nchw(x567, x572)

    # --- Small batch>1 sanity case for the channels-last path.
    xs = jax.random.normal(k3, (2, 4, 4, 128), dtype=jnp.float32)   # NHWC
    ss = jax.random.normal(k4, (2, 128, 1, 1), dtype=jnp.float32)
    ref_s = xs * jnp.transpose(ss, (0, 2, 3, 1))
    out_s = se_mul_channels_last(xs, ss)

    jax.block_until_ready((out_from_nhwc, out_nchw, out_s))

    assert out_nchw.shape == ref.shape
    assert jnp.allclose(out_nchw, ref, atol=1e-6, rtol=1e-6)
    assert jnp.allclose(out_from_nhwc, ref, atol=1e-6, rtol=1e-6)
    assert jnp.allclose(out_s, ref_s, atol=1e-6, rtol=1e-6)

    print("KERNEL_OK")
</pallas_src>

<mosaic_0001>
module attributes {stable_mosaic.version = 11 : i64} {
  func.func @_scale_mul_kernel(%arg0: memref<1x49x2064xf32, #tpu.memory_space<vmem>>, %arg1: memref<1x1x2064xf32, #tpu.memory_space<vmem>>, %arg2: memref<1x49x2064xf32, #tpu.memory_space<vmem>>) attributes {dimension_semantics = [], scalar_prefetch = 0 : i64, scratch_operands = 0 : i64, tpu.core_type = #tpu.core_type<tc>} {
    %c0 = arith.constant 0 : index
    %c0_0 = arith.constant 0 : index
    %c0_1 = arith.constant 0 : index
    %0 = vector.load %arg0[%c0, %c0_0, %c0_1] : memref<1x49x2064xf32, #tpu.memory_space<vmem>>, vector<1x49x2064xf32>
    %c0_2 = arith.constant 0 : index
    %c0_3 = arith.constant 0 : index
    %c0_4 = arith.constant 0 : index
    %1 = vector.load %arg1[%c0_2, %c0_3, %c0_4] : memref<1x1x2064xf32, #tpu.memory_space<vmem>>, vector<1x1x2064xf32>
    %2 = vector.broadcast %1 : vector<1x1x2064xf32> to vector<1x49x2064xf32>
    %3 = arith.mulf %0, %2 : vector<1x49x2064xf32>
    %c0_5 = arith.constant 0 : index
    %c0_6 = arith.constant 0 : index
    %c0_7 = arith.constant 0 : index
    %4 = vector.load %arg2[%c0_5, %c0_6, %c0_7] : memref<1x49x2064xf32, #tpu.memory_space<vmem>>, vector<1x49x2064xf32>
    tpu.vector_store %arg2[%c0_5, %c0_6, %c0_7], %3 {strides = array<i32>} : memref<1x49x2064xf32, #tpu.memory_space<vmem>>, vector<1x49x2064xf32>,
    return
  }
}

</mosaic_0001>

<llo_original>
// kernel: tpu_custom_call.1
$region0: #{tpu_custom_call.1}
  #allocation0 [shape = 'u32[]', space=smem, size = 0x4, offset = 0x4, fixed_abs, tag = 'smem constant byte address 0x4 - core index']
  #allocation1 [shape = 'u32[144,128]{1,0:T(1,128)}', space=vmem, size = 0x12000, scoped, tag = 'internal scratch']
  %s0 = inlined_call_operand.vmem [shape: f32[1,49,2064], index: 0, kind: input, shape index: {}, may-alias: {0,2}]
  %s1 = inlined_call_operand.vmem [shape: f32[1,1,2064], index: 1, kind: input, shape index: {}]
  %s2 = inlined_call_operand.vmem [shape: f32[1,49,2064], index: 2, kind: output, shape index: {}, may-alias: {0,2}]
  %s3 = sld [smem:[#allocation0]]
  $region18: #{tpu_custom_call.1} parent=0
    _
  %s5 = ssub.s32 1, %s3
  %s6 = scalar_select 0, %s5, %s3
  // Predicated region
  $region2: #{tpu_custom_call.1} parent=0 // pred_check
    _
  $region3: #{tpu_custom_call.1} parent=0 // pred_check_branch
    %8 = sbr.rel (0) target = $region5
  $region4: #{tpu_custom_call.1} parent=0 // pred_region
    _
  $region5: #{tpu_custom_call.1} parent=0 // pred_fallthru
    _
  // Predicated region
  $region6: #{tpu_custom_call.1} parent=0 // pred_check
    _
  $region7: #{tpu_custom_call.1} parent=0 // pred_check_branch
    %10 = sbr.rel (0) target = $region9
  $region8: #{tpu_custom_call.1} parent=0 // pred_region
    _
  $region9: #{tpu_custom_call.1} parent=0 // pred_fallthru
    _
  %v11 = vld [vmem:[%s0] sm:$0xff]
  %v12 = vld [vmem:[%s0 + $0x8] sm:$0xff]
  %v13 = vld [vmem:[%s0 + $0x10] sm:$0xff]
  %v14 = vld [vmem:[%s0 + $0x18] sm:$0xff]
  %v15 = vld [vmem:[%s0 + $0x20] sm:$0xff]
  %v16 = vld [vmem:[%s0 + $0x28] sm:$0xff]
  %v17 = vld [vmem:[%s0 + $0x30] sm:$0xff]
  %v18 = vld [vmem:[%s0 + $0x38] sm:$0xff]
  %v19 = vld [vmem:[%s0 + $0x40] sm:$0xff]
  %v20 = vld [vmem:[%s0 + $0x48] sm:$0xff]
  %v21 = vld [vmem:[%s0 + $0x50] sm:$0xff]
  %v22 = vld [vmem:[%s0 + $0x58] sm:$0xff]
  %v23 = vld [vmem:[%s0 + $0x60] sm:$0xff]
  %v24 = vld [vmem:[%s0 + $0x68] sm:$0xff]
  %v25 = vld [vmem:[%s0 + $0x70] sm:$0xff]
  %v26 = vld [vmem:[%s0 + $0x78] sm:$0xff]
  %v27 = vld [vmem:[%s0 + $0x80] sm:$0xff]
  %v28 = vld [vmem:[%s0 + $0x88] sm:$0xff]
  %v29 = vld [vmem:[%s0 + $0x90] sm:$0xff]
  %v30 = vld [vmem:[%s0 + $0x98] sm:$0xff]
  %v31 = vld [vmem:[%s0 + $0xa0] sm:$0xff]
  %v32 = vld [vmem:[%s0 + $0xa8] sm:$0xff]
  %v33 = vld [vmem:[%s0 + $0xb0] sm:$0xff]
  %v34 = vld [vmem:[%s0 + $0xb8] sm:$0xff]
  %v35 = vld [vmem:[%s0 + $0xc0] sm:$0xff]
  %v36 = vld [vmem:[%s0 + $0xc8] sm:$0xff]
  %v37 = vld [vmem:[%s0 + $0xd0] sm:$0xff]
  %v38 = vld [vmem:[%s0 + $0xd8] sm:$0xff]
  %v39 = vld [vmem:[%s0 + $0xe0] sm:$0xff]
  %v40 = vld [vmem:[%s0 + $0xe8] sm:$0xff]
  %v41 = vld [vmem:[%s0 + $0xf0] sm:$0xff]
  %v42 = vld [vmem:[%s0 + $0xf8] sm:$0xff]
  %v43 = vld [vmem:[%s0 + $0x100] sm:$0xff]
  %v44 = vld [vmem:[%s0 + $0x108] sm:$0xff]
  %v45 = vld [vmem:[%s0 + $0x110] sm:$0xff]
  %v46 = vld [vmem:[%s0 + $0x118] sm:$0xff]
  %v47 = vld [vmem:[%s0 + $0x120] sm:$0xff]
  %v48 = vld [vmem:[%s0 + $0x128] sm:$0xff]
  %v49 = vld [vmem:[%s0 + $0x130] sm:$0xff]
  %v50 = vld [vmem:[%s0 + $0x138] sm:$0xff]
  %v51 = vld [vmem:[%s0 + $0x140] sm:$0xff]
  %v52 = vld [vmem:[%s0 + $0x148] sm:$0xff]
  %v53 = vld [vmem:[%s0 + $0x150] sm:$0xff]
  %v54 = vld [vmem:[%s0 + $0x158] sm:$0xff]
  %v55 = vld [vmem:[%s0 + $0x160] sm:$0xff]
  %v56 = vld [vmem:[%s0 + $0x168] sm:$0xff]
  %v57 = vld [vmem:[%s0 + $0x170] sm:$0xff]
  %v58 = vld [vmem:[%s0 + $0x178] sm:$0xff]
  %v59 = vld [vmem:[%s0 + $0x180] sm:$0xff]
  %v60 = vld [vmem:[%s0 + $0x188] sm:$0xff]
  %v61 = vld [vmem:[%s0 + $0x190] sm:$0xff]
  %v62 = vld [vmem:[%s0 + $0x198] sm:$0xff]
  %v63 = vld [vmem:[%s0 + $0x1a0] sm:$0xff]
  %v64 = vld [vmem:[%s0 + $0x1a8] sm:$0xff]
  %v65 = vld [vmem:[%s0 + $0x1b0] sm:$0xff]
  %v66 = vld [vmem:[%s0 + $0x1b8] sm:$0xff]
  %v67 = vld [vmem:[%s0 + $0x1c0] sm:$0xff]
  %v68 = vld [vmem:[%s0 + $0x1c8] sm:$0xff]
  %v69 = vld [vmem:[%s0 + $0x1d0] sm:$0xff]
  %v70 = vld [vmem:[%s0 + $0x1d8] sm:$0xff]
  %v71 = vld [vmem:[%s0 + $0x1e0] sm:$0xff]
  %v72 = vld [vmem:[%s0 + $0x1e8] sm:$0xff]
  %v73 = vld [vmem:[%s0 + $0x1f0] sm:$0xff]
  %v74 = vld [vmem:[%s0 + $0x1f8] sm:$0xff]
  %v75 = vld [vmem:[%s0 + $0x200] sm:$0xff]
  %v76 = vld [vmem:[%s0 + $0x208] sm:$0xff]
  %v77 = vld [vmem:[%s0 + $0x210] sm:$0xff]
  %v78 = vld [vmem:[%s0 + $0x218] sm:$0xff]
  %v79 = vld [vmem:[%s0 + $0x220] sm:$0xff]
  %v80 = vld [vmem:[%s0 + $0x228] sm:$0xff]
  %v81 = vld [vmem:[%s0 + $0x230] sm:$0xff]
  %v82 = vld [vmem:[%s0 + $0x238] sm:$0xff]
  %v83 = vld [vmem:[%s0 + $0x240] sm:$0xff]
  %v84 = vld [vmem:[%s0 + $0x248] sm:$0xff]
  %v85 = vld [vmem:[%s0 + $0x250] sm:$0xff]
  %v86 = vld [vmem:[%s0 + $0x258] sm:$0xff]
  %v87 = vld [vmem:[%s0 + $0x260] sm:$0xff]
  %v88 = vld [vmem:[%s0 + $0x268] sm:$0xff]
  %v89 = vld [vmem:[%s0 + $0x270] sm:$0xff]
  %v90 = vld [vmem:[%s0 + $0x278] sm:$0xff]
  %v91 = vld [vmem:[%s0 + $0x280] sm:$0xff]
  %v92 = vld [vmem:[%s0 + $0x288] sm:$0xff]
  %v93 = vld [vmem:[%s0 + $0x290] sm:$0xff]
  %v94 = vld [vmem:[%s0 + $0x298] sm:$0xff]
  %v95 = vld [vmem:[%s0 + $0x2a0] sm:$0xff]
  %v96 = vld [vmem:[%s0 + $0x2a8] sm:$0xff]
  %v97 = vld [vmem:[%s0 + $0x2b0] sm:$0xff]
  %v98 = vld [vmem:[%s0 + $0x2b8] sm:$0xff]
  %v99 = vld [vmem:[%s0 + $0x2c0] sm:$0xff]
  %v100 = vld [vmem:[%s0 + $0x2c8] sm:$0xff]
  %v101 = vld [vmem:[%s0 + $0x2d0] sm:$0xff]
  %v102 = vld [vmem:[%s0 + $0x2d8] sm:$0xff]
  %v103 = vld [vmem:[%s0 + $0x2e0] sm:$0xff]
  %v104 = vld [vmem:[%s0 + $0x2e8] sm:$0xff]
  %v105 = vld [vmem:[%s0 + $0x2f0] sm:$0xff]
  %v106 = vld [vmem:[%s0 + $0x2f8] sm:$0xff]
  %v107 = vld [vmem:[%s0 + $0x300] sm:$0xff]
  %v108 = vld [vmem:[%s0 + $0x308] sm:$0xff]
  %v109 = vld [vmem:[%s0 + $0x310] sm:$0xff]
  %v110 = vld [vmem:[%s0 + $0x318] sm:$0xff]
  %v111 = vld [vmem:[%s0 + $0x320] sm:$0xff]
  %v112 = vld [vmem:[%s0 + $0x328] sm:$0xff]
  %v113 = vld [vmem:[%s0 + $0x330] sm:$0x1]
  %v114 = vld [vmem:[%s0 + $0x338] sm:$0x1]
  %v115 = vld [vmem:[%s0 + $0x340] sm:$0x1]
  %v116 = vld [vmem:[%s0 + $0x348] sm:$0x1]
  %v117 = vld [vmem:[%s0 + $0x350] sm:$0x1]
  %v118 = vld [vmem:[%s0 + $0x358] sm:$0x1]
  %v119 = vld [vmem:[%s0 + $0x360] sm:$0x1]
  %v120 = vld [vmem:[%s0 + $0x368] sm:$0x1]
  %v121 = vld [vmem:[%s0 + $0x370] sm:$0x1]
  %v122 = vld [vmem:[%s0 + $0x378] sm:$0x1]
  %v123 = vld [vmem:[%s0 + $0x380] sm:$0x1]
  %v124 = vld [vmem:[%s0 + $0x388] sm:$0x1]
  %v125 = vld [vmem:[%s0 + $0x390] sm:$0x1]
  %v126 = vld [vmem:[%s0 + $0x398] sm:$0x1]
  %v127 = vld [vmem:[%s0 + $0x3a0] sm:$0x1]
  %v128 = vld [vmem:[%s0 + $0x3a8] sm:$0x1]
  %v129 = vld [vmem:[%s0 + $0x3b0] sm:$0x1]
  %v130 = vld [vmem:[%s1] sm:$0xff]
  %v131 = vld [vmem:[%s1 + $0x8] sm:$0xff]
  %v132 = vld [vmem:[%s1 + $0x10] sm:$0x1]
  %v136 = vlaneseq
  %v137 = vshrl.u32 %v136, 7
  %v138 = vsub.s32 0, %v137
  %v139 = vrot.slane %v130, %v138
  %v140 = vlaneseq
  %v141 = vshrl.u32 %v140, 7
  %v142 = vsub.s32 1, %v141
  %v143 = vrot.slane %v130, %v142
  %v144 = vlaneseq
  %v145 = vshrl.u32 %v144, 7
  %v146 = vsub.s32 2, %v145
  %v147 = vrot.slane %v130, %v146
  %v148 = vlaneseq
  %v149 = vshrl.u32 %v148, 7
  %v150 = vsub.s32 3, %v149
  %v151 = vrot.slane %v130, %v150
  %v152 = vlaneseq
  %v153 = vshrl.u32 %v152, 7
  %v154 = vsub.s32 4, %v153
  %v155 = vrot.slane %v130, %v154
  %v156 = vlaneseq
  %v157 = vshrl.u32 %v156, 7
  %v158 = vsub.s32 5, %v157
  %v159 = vrot.slane %v130, %v158
  %v160 = vlaneseq
  %v161 = vshrl.u32 %v160, 7
  %v162 = vsub.s32 6, %v161
  %v163 = vrot.slane %v130, %v162
  %v164 = vlaneseq
  %v165 = vshrl.u32 %v164, 7
  %v166 = vsub.s32 7, %v165
  %v167 = vrot.slane %v130, %v166
  %v168 = vlaneseq
  %v169 = vshrl.u32 %v168, 7
  %v170 = vsub.s32 0, %v169
  %v171 = vrot.slane %v131, %v170
  %v172 = vlaneseq
  %v173 = vshrl.u32 %v172, 7
  %v174 = vsub.s32 1, %v173
  %v175 = vrot.slane %v131, %v174
  %v176 = vlaneseq
  %v177 = vshrl.u32 %v176, 7
  %v178 = vsub.s32 2, %v177
  %v179 = vrot.slane %v131, %v178
  %v180 = vlaneseq
  %v181 = vshrl.u32 %v180, 7
  %v182 = vsub.s32 3, %v181
  %v183 = vrot.slane %v131, %v182
  %v184 = vlaneseq
  %v185 = vshrl.u32 %v184, 7
  %v186 = vsub.s32 4, %v185
  %v187 = vrot.slane %v131, %v186
  %v188 = vlaneseq
  %v189 = vshrl.u32 %v188, 7
  %v190 = vsub.s32 5, %v189
  %v191 = vrot.slane %v131, %v190
  %v192 = vlaneseq
  %v193 = vshrl.u32 %v192, 7
  %v194 = vsub.s32 6, %v193
  %v195 = vrot.slane %v131, %v194
  %v196 = vlaneseq
  %v197 = vshrl.u32 %v196, 7
  %v198 = vsub.s32 7, %v197
  %v199 = vrot.slane %v131, %v198
  %v200 = vlaneseq
  %v201 = vshrl.u32 %v200, 7
  %v202 = vsub.s32 0, %v201
  %v203 = vrot.slane %v132, %v202
  %v221 = vmul.f32 %v11, %v139
  %v222 = vmul.f32 %v12, %v143
  %v223 = vmul.f32 %v13, %v147
  %v224 = vmul.f32 %v14, %v151
  %v225 = vmul.f32 %v15, %v155
  %v226 = vmul.f32 %v16, %v159
  %v227 = vmul.f32 %v17, %v163
  %v228 = vmul.f32 %v18, %v167
  %v229 = vmul.f32 %v19, %v171
  %v230 = vmul.f32 %v20, %v175
  %v231 = vmul.f32 %v21, %v179
  %v232 = vmul.f32 %v22, %v183
  %v233 = vmul.f32 %v23, %v187
  %v234 = vmul.f32 %v24, %v191
  %v235 = vmul.f32 %v25, %v195
  %v236 = vmul.f32 %v26, %v199
  %v237 = vmul.f32 %v27, %v203
  %v238 = vmul.f32 %v28, %v139
  %v239 = vmul.f32 %v29, %v143
  %v240 = vmul.f32 %v30, %v147
  %v241 = vmul.f32 %v31, %v151
  %v242 = vmul.f32 %v32, %v155
  %v243 = vmul.f32 %v33, %v159
  %v244 = vmul.f32 %v34, %v163
  %v245 = vmul.f32 %v35, %v167
  %v246 = vmul.f32 %v36, %v171
  %v247 = vmul.f32 %v37, %v175
  %v248 = vmul.f32 %v38, %v179
  %v249 = vmul.f32 %v39, %v183
  %v250 = vmul.f32 %v40, %v187
  %v251 = vmul.f32 %v41, %v191
  %v252 = vmul.f32 %v42, %v195
  %v253 = vmul.f32 %v43, %v199
  %v254 = vmul.f32 %v44, %v203
  %v255 = vmul.f32 %v45, %v139
  %v256 = vmul.f32 %v46, %v143
  %v257 = vmul.f32 %v47, %v147
  %v258 = vmul.f32 %v48, %v151
  %v259 = vmul.f32 %v49, %v155
  %v260 = vmul.f32 %v50, %v159
  %v261 = vmul.f32 %v51, %v163
  %v262 = vmul.f32 %v52, %v167
  %v263 = vmul.f32 %v53, %v171
  %v264 = vmul.f32 %v54, %v175
  %v265 = vmul.f32 %v55, %v179
  %v266 = vmul.f32 %v56, %v183
  %v267 = vmul.f32 %v57, %v187
  %v268 = vmul.f32 %v58, %v191
  %v269 = vmul.f32 %v59, %v195
  %v270 = vmul.f32 %v60, %v199
  %v271 = vmul.f32 %v61, %v203
  %v272 = vmul.f32 %v62, %v139
  %v273 = vmul.f32 %v63, %v143
  %v274 = vmul.f32 %v64, %v147
  %v275 = vmul.f32 %v65, %v151
  %v276 = vmul.f32 %v66, %v155
  %v277 = vmul.f32 %v67, %v159
  %v278 = vmul.f32 %v68, %v163
  %v279 = vmul.f32 %v69, %v167
  %v280 = vmul.f32 %v70, %v171
  %v281 = vmul.f32 %v71, %v175
  %v282 = vmul.f32 %v72, %v179
  %v283 = vmul.f32 %v73, %v183
  %v284 = vmul.f32 %v74, %v187
  %v285 = vmul.f32 %v75, %v191
  %v286 = vmul.f32 %v76, %v195
  %v287 = vmul.f32 %v77, %v199
  %v288 = vmul.f32 %v78, %v203
  %v289 = vmul.f32 %v79, %v139
  %v290 = vmul.f32 %v80, %v143
  %v291 = vmul.f32 %v81, %v147
  %v292 = vmul.f32 %v82, %v151
  %v293 = vmul.f32 %v83, %v155
  %v294 = vmul.f32 %v84, %v159
  %v295 = vmul.f32 %v85, %v163
  %v296 = vmul.f32 %v86, %v167
  %v297 = vmul.f32 %v87, %v171
  %v298 = vmul.f32 %v88, %v175
  %v299 = vmul.f32 %v89, %v179
  %v300 = vmul.f32 %v90, %v183
  %v301 = vmul.f32 %v91, %v187
  %v302 = vmul.f32 %v92, %v191
  %v303 = vmul.f32 %v93, %v195
  %v304 = vmul.f32 %v94, %v199
  %v305 = vmul.f32 %v95, %v203
  %v306 = vmul.f32 %v96, %v139
  %v307 = vmul.f32 %v97, %v143
  %v308 = vmul.f32 %v98, %v147
  %v309 = vmul.f32 %v99, %v151
  %v310 = vmul.f32 %v100, %v155
  %v311 = vmul.f32 %v101, %v159
  %v312 = vmul.f32 %v102, %v163
  %v313 = vmul.f32 %v103, %v167
  %v314 = vmul.f32 %v104, %v171
  %v315 = vmul.f32 %v105, %v175
  %v316 = vmul.f32 %v106, %v179
  %v317 = vmul.f32 %v107, %v183
  %v318 = vmul.f32 %v108, %v187
  %v319 = vmul.f32 %v109, %v191
  %v320 = vmul.f32 %v110, %v195
  %v321 = vmul.f32 %v111, %v199
  %v322 = vmul.f32 %v112, %v203
  %v323 = vmul.f32 %v113, %v139
  %v324 = vmul.f32 %v114, %v143
  %v325 = vmul.f32 %v115, %v147
  %v326 = vmul.f32 %v116, %v151
  %v327 = vmul.f32 %v117, %v155
  %v328 = vmul.f32 %v118, %v159
  %v329 = vmul.f32 %v119, %v163
  %v330 = vmul.f32 %v120, %v167
  %v331 = vmul.f32 %v121, %v171
  %v332 = vmul.f32 %v122, %v175
  %v333 = vmul.f32 %v123, %v179
  %v334 = vmul.f32 %v124, %v183
  %v335 = vmul.f32 %v125, %v187
  %v336 = vmul.f32 %v126, %v191
  %v337 = vmul.f32 %v127, %v195
  %v338 = vmul.f32 %v128, %v199
  %v339 = vmul.f32 %v129, %v203
  %340 = vst [vmem:[%s2] sm:$0xff] %v221
  %341 = vst [vmem:[%s2 + $0x8] sm:$0xff] %v222
  %342 = vst [vmem:[%s2 + $0x10] sm:$0xff] %v223
  %343 = vst [vmem:[%s2 + $0x18] sm:$0xff] %v224
  %344 = vst [vmem:[%s2 + $0x20] sm:$0xff] %v225
  %345 = vst [vmem:[%s2 + $0x28] sm:$0xff] %v226
  %346 = vst [vmem:[%s2 + $0x30] sm:$0xff] %v227
  %347 = vst [vmem:[%s2 + $0x38] sm:$0xff] %v228
  %348 = vst [vmem:[%s2 + $0x40] sm:$0xff] %v229
  %349 = vst [vmem:[%s2 + $0x48] sm:$0xff] %v230
  %350 = vst [vmem:[%s2 + $0x50] sm:$0xff] %v231
  %351 = vst [vmem:[%s2 + $0x58] sm:$0xff] %v232
  %352 = vst [vmem:[%s2 + $0x60] sm:$0xff] %v233
  %353 = vst [vmem:[%s2 + $0x68] sm:$0xff] %v234
  %354 = vst [vmem:[%s2 + $0x70] sm:$0xff] %v235
  %355 = vst [vmem:[%s2 + $0x78] sm:$0xff] %v236
  %vm356 = vcmask 130048
  %357 = vst.msk [vmem:[%s2 + $0x80] sm:$0xff] %vm356, %v237
  %358 = vst [vmem:[%s2 + $0x88] sm:$0xff] %v238
  %359 = vst [vmem:[%s2 + $0x90] sm:$0xff] %v239
  %360 = vst [vmem:[%s2 + $0x98] sm:$0xff] %v240
  %361 = vst [vmem:[%s2 + $0xa0] sm:$0xff] %v241
  %362 = vst [vmem:[%s2 + $0xa8] sm:$0xff] %v242
  %363 = vst [vmem:[%s2 + $0xb0] sm:$0xff] %v243
  %364 = vst [vmem:[%s2 + $0xb8] sm:$0xff] %v244
  %365 = vst [vmem:[%s2 + $0xc0] sm:$0xff] %v245
  %366 = vst [vmem:[%s2 + $0xc8] sm:$0xff] %v246
  %367 = vst [vmem:[%s2 + $0xd0] sm:$0xff] %v247
  %368 = vst [vmem:[%s2 + $0xd8] sm:$0xff] %v248
  %369 = vst [vmem:[%s2 + $0xe0] sm:$0xff] %v249
  %370 = vst [vmem:[%s2 + $0xe8] sm:$0xff] %v250
  %371 = vst [vmem:[%s2 + $0xf0] sm:$0xff] %v251
  %372 = vst [vmem:[%s2 + $0xf8] sm:$0xff] %v252
  %373 = vst [vmem:[%s2 + $0x100] sm:$0xff] %v253
  %374 = vst.msk [vmem:[%s2 + $0x108] sm:$0xff] %vm356, %v254
  %375 = vst [vmem:[%s2 + $0x110] sm:$0xff] %v255
  %376 = vst [vmem:[%s2 + $0x118] sm:$0xff] %v256
  %377 = vst [vmem:[%s2 + $0x120] sm:$0xff] %v257
  %378 = vst [vmem:[%s2 + $0x128] sm:$0xff] %v258
  %379 = vst [vmem:[%s2 + $0x130] sm:$0xff] %v259
  %380 = vst [vmem:[%s2 + $0x138] sm:$0xff] %v260
  %381 = vst [vmem:[%s2 + $0x140] sm:$0xff] %v261
  %382 = vst [vmem:[%s2 + $0x148] sm:$0xff] %v262
  %383 = vst [vmem:[%s2 + $0x150] sm:$0xff] %v263
  %384 = vst [vmem:[%s2 + $0x158] sm:$0xff] %v264
  %385 = vst [vmem:[%s2 + $0x160] sm:$0xff] %v265
  %386 = vst [vmem:[%s2 + $0x168] sm:$0xff] %v266
  %387 = vst [vmem:[%s2 + $0x170] sm:$0xff] %v267
  %388 = vst [vmem:[%s2 + $0x178] sm:$0xff] %v268
  %389 = vst [vmem:[%s2 + $0x180] sm:$0xff] %v269
  %390 = vst [vmem:[%s2 + $0x188] sm:$0xff] %v270
  %391 = vst.msk [vmem:[%s2 + $0x190] sm:$0xff] %vm356, %v271
  %392 = vst [vmem:[%s2 + $0x198] sm:$0xff] %v272
  %393 = vst [vmem:[%s2 + $0x1a0] sm:$0xff] %v273
  %394 = vst [vmem:[%s2 + $0x1a8] sm:$0xff] %v274
  %395 = vst [vmem:[%s2 + $0x1b0] sm:$0xff] %v275
  %396 = vst [vmem:[%s2 + $0x1b8] sm:$0xff] %v276
  %397 = vst [vmem:[%s2 + $0x1c0] sm:$0xff] %v277
  %398 = vst [vmem:[%s2 + $0x1c8] sm:$0xff] %v278
  %399 = vst [vmem:[%s2 + $0x1d0] sm:$0xff] %v279
  %400 = vst [vmem:[%s2 + $0x1d8] sm:$0xff] %v280
  %401 = vst [vmem:[%s2 + $0x1e0] sm:$0xff] %v281
  %402 = vst [vmem:[%s2 + $0x1e8] sm:$0xff] %v282
  %403 = vst [vmem:[%s2 + $0x1f0] sm:$0xff] %v283
  %404 = vst [vmem:[%s2 + $0x1f8] sm:$0xff] %v284
  %405 = vst [vmem:[%s2 + $0x200] sm:$0xff] %v285
  %406 = vst [vmem:[%s2 + $0x208] sm:$0xff] %v286
  %407 = vst [vmem:[%s2 + $0x210] sm:$0xff] %v287
  %408 = vst.msk [vmem:[%s2 + $0x218] sm:$0xff] %vm356, %v288
  %409 = vst [vmem:[%s2 + $0x220] sm:$0xff] %v289
  %410 = vst [vmem:[%s2 + $0x228] sm:$0xff] %v290
  %411 = vst [vmem:[%s2 + $0x230] sm:$0xff] %v291
  %412 = vst [vmem:[%s2 + $0x238] sm:$0xff] %v292
  %413 = vst [vmem:[%s2 + $0x240] sm:$0xff] %v293
  %414 = vst [vmem:[%s2 + $0x248] sm:$0xff] %v294
  %415 = vst [vmem:[%s2 + $0x250] sm:$0xff] %v295
  %416 = vst [vmem:[%s2 + $0x258] sm:$0xff] %v296
  %417 = vst [vmem:[%s2 + $0x260] sm:$0xff] %v297
  %418 = vst [vmem:[%s2 + $0x268] sm:$0xff] %v298
  %419 = vst [vmem:[%s2 + $0x270] sm:$0xff] %v299
  %420 = vst [vmem:[%s2 + $0x278] sm:$0xff] %v300
  %421 = vst [vmem:[%s2 + $0x280] sm:$0xff] %v301
  %422 = vst [vmem:[%s2 + $0x288] sm:$0xff] %v302
  %423 = vst [vmem:[%s2 + $0x290] sm:$0xff] %v303
  %424 = vst [vmem:[%s2 + $0x298] sm:$0xff] %v304
  %425 = vst.msk [vmem:[%s2 + $0x2a0] sm:$0xff] %vm356, %v305
  %426 = vst [vmem:[%s2 + $0x2a8] sm:$0xff] %v306
  %427 = vst [vmem:[%s2 + $0x2b0] sm:$0xff] %v307
  %428 = vst [vmem:[%s2 + $0x2b8] sm:$0xff] %v308
  %429 = vst [vmem:[%s2 + $0x2c0] sm:$0xff] %v309
  %430 = vst [vmem:[%s2 + $0x2c8] sm:$0xff] %v310
  %431 = vst [vmem:[%s2 + $0x2d0] sm:$0xff] %v311
  %432 = vst [vmem:[%s2 + $0x2d8] sm:$0xff] %v312
  %433 = vst [vmem:[%s2 + $0x2e0] sm:$0xff] %v313
  %434 = vst [vmem:[%s2 + $0x2e8] sm:$0xff] %v314
  %435 = vst [vmem:[%s2 + $0x2f0] sm:$0xff] %v315
  %436 = vst [vmem:[%s2 + $0x2f8] sm:$0xff] %v316
  %437 = vst [vmem:[%s2 + $0x300] sm:$0xff] %v317
  %438 = vst [vmem:[%s2 + $0x308] sm:$0xff] %v318
  %439 = vst [vmem:[%s2 + $0x310] sm:$0xff] %v319
  %440 = vst [vmem:[%s2 + $0x318] sm:$0xff] %v320
  %441 = vst [vmem:[%s2 + $0x320] sm:$0xff] %v321
  %442 = vst.msk [vmem:[%s2 + $0x328] sm:$0xff] %vm356, %v322
  %443 = vst [vmem:[%s2 + $0x330] sm:$0x1] %v323
  %444 = vst [vmem:[%s2 + $0x338] sm:$0x1] %v324
  %445 = vst [vmem:[%s2 + $0x340] sm:$0x1] %v325
  %446 = vst [vmem:[%s2 + $0x348] sm:$0x1] %v326
  %447 = vst [vmem:[%s2 + $0x350] sm:$0x1] %v327
  %448 = vst [vmem:[%s2 + $0x358] sm:$0x1] %v328
  %449 = vst [vmem:[%s2 + $0x360] sm:$0x1] %v329
  %450 = vst [vmem:[%s2 + $0x368] sm:$0x1] %v330
  %451 = vst [vmem:[%s2 + $0x370] sm:$0x1] %v331
  %452 = vst [vmem:[%s2 + $0x378] sm:$0x1] %v332
  %453 = vst [vmem:[%s2 + $0x380] sm:$0x1] %v333
  %454 = vst [vmem:[%s2 + $0x388] sm:$0x1] %v334
  %455 = vst [vmem:[%s2 + $0x390] sm:$0x1] %v335
  %456 = vst [vmem:[%s2 + $0x398] sm:$0x1] %v336
  %457 = vst [vmem:[%s2 + $0x3a0] sm:$0x1] %v337
  %458 = vst [vmem:[%s2 + $0x3a8] sm:$0x1] %v338
  %vm459 = vcmask 122880
  %460 = vst.msk [vmem:[%s2 + $0x3b0] sm:$0x1] %vm459, %v339
  // Predicated region
  $region10: #{tpu_custom_call.1} parent=0 // pred_check
    _
  $region11: #{tpu_custom_call.1} parent=0 // pred_check_branch
    %462 = sbr.rel (0) target = $region13
  $region12: #{tpu_custom_call.1} parent=0 // pred_region
    _
  $region13: #{tpu_custom_call.1} parent=0 // pred_fallthru
    _
  // Predicated region
  $region14: #{tpu_custom_call.1} parent=0 // pred_check
    _
  $region15: #{tpu_custom_call.1} parent=0 // pred_check_branch
    %464 = sbr.rel (0) target = $region17
  $region16: #{tpu_custom_call.1} parent=0 // pred_region
    _
  $region17: #{tpu_custom_call.1} parent=0 // pred_fallthru
    _

</llo_original>
